<compile_context>
chip_gen: v7x
topology: tpu7x:2x2x1
jax: 0.10.0
libtpu: 0.0.40
codegen_flags: <defaults>
</compile_context>

<pallas_src>
import jax
import jax.numpy as jnp
from jax import lax
from jax.experimental import pallas as pl
from jax.experimental.pallas import tpu as pltpu


# ---------------------------------------------------------------------------
# Kernels
# ---------------------------------------------------------------------------

def _fwd_kernel(x1_ref, w1_ref, b1_ref, x2_ref, w2_ref, b2_ref,
                out1_ref, out2_ref):
    """Inference variant: two Linear layers, no loss path, no target DMA."""
    y1 = jnp.dot(x1_ref[...].astype(jnp.bfloat16), w1_ref[...],
                 preferred_element_type=jnp.float32) + b1_ref[...]
    y2 = jnp.dot(x2_ref[...].astype(jnp.bfloat16), w2_ref[...],
                 preferred_element_type=jnp.float32) + b2_ref[...]
    out1_ref[...] = y1.astype(out1_ref.dtype)
    out2_ref[...] = y2.astype(out2_ref.dtype)


def _make_train_kernel(b_true, block_b, mask_needed):
    """Training variant: Linear layers + per-tile MSE partial sums.

    Each grid step writes a lane-dense (8, H) partial sum-of-squares block
    (independent per step -> batch axis stays "parallel"); the wrapper does
    the final scalar reduction.  `b_true` / `block_b` / `mask_needed` are
    static Python values closed over: the ragged-row mask is only emitted
    when the batch does not divide the tile.
    """
    def kernel(x1_ref, w1_ref, b1_ref, x2_ref, w2_ref, b2_ref, tgt_ref,
               out1_ref, out2_ref, part_ref):
        # layer1 / layer2 (bf16 MXU matmul, f32 accumulate, f32 bias add)
        y1 = jnp.dot(x1_ref[...].astype(jnp.bfloat16), w1_ref[...],
                     preferred_element_type=jnp.float32) + b1_ref[...]
        y2 = jnp.dot(x2_ref[...].astype(jnp.bfloat16), w2_ref[...],
                     preferred_element_type=jnp.float32) + b2_ref[...]
        out1_ref[...] = y1.astype(out1_ref.dtype)
        out2_ref[...] = y2.astype(out2_ref.dtype)

        diff = y1 + y2 - tgt_ref[...].astype(jnp.float32)
        if mask_needed:
            # Rows beyond the true batch (ragged last tile) may contain
            # garbage from the partial-block DMA -> select them to zero.
            i = pl.program_id(0)
            row = lax.broadcasted_iota(jnp.int32, diff.shape, 0) + i * block_b
            diff = jnp.where(row < b_true, diff, 0.0)

        # Per-tile partial sum of squares, folded onto an (8, H) slab so the
        # output stays sublane/lane aligned (pure VPU adds, no XLU reduce).
        d2 = diff * diff
        part_ref[...] = d2.reshape(block_b // 8, 8, d2.shape[-1]).sum(axis=0)

    return kernel


# ---------------------------------------------------------------------------
# Wrapper
# ---------------------------------------------------------------------------

def _round_up(x, m):
    return ((x + m - 1) // m) * m


def _pick_block_b(B, D1, D2, H, out_bytes, training, vmem_budget):
    """Largest batch tile (multiple of 16, <=512) whose double-buffered
    working set + resident weights fits the VMEM budget."""
    resident = (D1 + D2) * H * 2 + 2 * H * 4          # bf16 weights + f32 biases

    def tile_bytes(bb):
        t = bb * (D1 + D2) * 4 + 2 * bb * H * out_bytes
        if training:
            t += bb * H * 4 + 8 * H * 4               # targets + partial block
        return 2 * t                                   # double-buffered

    bb = min(max(16, _round_up(B, 16)), 512)
    while bb > 16 and resident + tile_bytes(bb) > vmem_budget:
        bb = max(16, _round_up(bb // 2, 16))
    return bb


def model_forward(input1, input2, params, targets=None, *,
                  block_b=None, out_dtype=jnp.bfloat16):
    """Pallas-backed forward matching the documented Model.forward contract.

    Returns {"output1", "output2"} and, if `targets` is given, "loss" (scalar
    f32).  Outputs default to bf16 (HBM-bandwidth bound kernel); pass
    out_dtype=jnp.float32 if downstream needs full precision.
    """
    w1, b1, w2, b2 = params["w1"], params["b1"], params["w2"], params["b2"]
    B, D1 = input1.shape
    B2, D2 = input2.shape
    assert B == B2, "input1/input2 batch mismatch"
    H = w1.shape[1]

    vmem_limit = 32 * 1024 * 1024            # safe on v5e/v6e/v7x physical VMEM
    out_bytes = jnp.dtype(out_dtype).itemsize
    training = targets is not None
    if block_b is None:
        block_b = _pick_block_b(B, D1, D2, H, out_bytes, training,
                                vmem_budget=(vmem_limit * 3) // 4)
    assert block_b % 16 == 0, "block_b must be a multiple of 16 (bf16 sublanes)"
    num_tiles = pl.cdiv(B, block_b)

    # Weights resident in VMEM (grid-invariant); bf16 for MXU + half traffic.
    # init_params already stores bf16; astype is a no-op in that case.
    w1b = w1.astype(jnp.bfloat16)
    w2b = w2.astype(jnp.bfloat16)
    b1f = jnp.asarray(b1, jnp.float32).reshape(1, H)
    b2f = jnp.asarray(b2, jnp.float32).reshape(1, H)

    # Batch-tiled activations / outputs; grid-invariant (resident) weights.
    x1_spec = pl.BlockSpec((block_b, D1), lambda i: (i, 0))
    x2_spec = pl.BlockSpec((block_b, D2), lambda i: (i, 0))
    w1_spec = pl.BlockSpec((D1, H), lambda i: (0, 0))
    w2_spec = pl.BlockSpec((D2, H), lambda i: (0, 0))
    b_spec = pl.BlockSpec((1, H), lambda i: (0, 0))
    o_spec = pl.BlockSpec((block_b, H), lambda i: (i, 0))

    flops = 2 * B * (D1 + D2) * H
    bytes_in = (B * (D1 + D2)) * 4 + (w1b.size + w2b.size) * 2 \
        + (b1f.size + b2f.size) * 4
    bytes_out = 2 * B * H * out_bytes

    if not training:
        out1, out2 = pl.pallas_call(
            _fwd_kernel,
            out_shape=(jax.ShapeDtypeStruct((B, H), out_dtype),
                       jax.ShapeDtypeStruct((B, H), out_dtype)),
            grid=(num_tiles,),
            in_specs=[x1_spec, w1_spec, b_spec, x2_spec, w2_spec, b_spec],
            out_specs=(o_spec, o_spec),
            compiler_params=pltpu.CompilerParams(
                dimension_semantics=("parallel",),
                vmem_limit_bytes=vmem_limit),
            cost_estimate=pl.CostEstimate(
                flops=flops, transcendentals=0,
                bytes_accessed=bytes_in + bytes_out),
        )(input1, w1b, b1f, input2, w2b, b2f)
        return {"output1": out1, "output2": out2}

    tgt = targets.astype(jnp.float32)
    mask_needed = (B % block_b) != 0
    part_spec = pl.BlockSpec((8, H), lambda i: (i, 0))

    out1, out2, partials = pl.pallas_call(
        _make_train_kernel(B, block_b, mask_needed),
        out_shape=(jax.ShapeDtypeStruct((B, H), out_dtype),
                   jax.ShapeDtypeStruct((B, H), out_dtype),
                   jax.ShapeDtypeStruct((num_tiles * 8, H), jnp.float32)),
        grid=(num_tiles,),
        in_specs=[x1_spec, w1_spec, b_spec, x2_spec, w2_spec, b_spec,
                  pl.BlockSpec((block_b, H), lambda i: (i, 0))],
        out_specs=(o_spec, o_spec, part_spec),
        # Per-tile partial losses are independent -> batch axis is parallel
        # even in training (v7x megacore can split it).
        compiler_params=pltpu.CompilerParams(
            dimension_semantics=("parallel",),
            vmem_limit_bytes=vmem_limit),
        cost_estimate=pl.CostEstimate(
            flops=flops, transcendentals=0,
            bytes_accessed=bytes_in + bytes_out + B * H * 4
            + num_tiles * 8 * H * 4),
    )(input1, w1b, b1f, input2, w2b, b2f, tgt)

    loss = jnp.sum(partials) / jnp.float32(B * H)
    return {"output1": out1, "output2": out2, "loss": loss}


def init_params(key, d1, d2, hidden):
    """Deterministic parameter init (synthetic; not a checkpoint load).

    Weights are stored in bf16 once here (hoisted out of the per-call hot
    path); biases stay f32.
    """
    k1, k2, k3, k4 = jax.random.split(key, 4)
    return {
        "w1": (jax.random.normal(k1, (d1, hidden), jnp.float32)
               / jnp.sqrt(d1)).astype(jnp.bfloat16),
        "b1": 0.01 * jax.random.normal(k2, (1, hidden), jnp.float32),
        "w2": (jax.random.normal(k3, (d2, hidden), jnp.float32)
               / jnp.sqrt(d2)).astype(jnp.bfloat16),
        "b2": 0.01 * jax.random.normal(k4, (1, hidden), jnp.float32),
    }


def _reference(input1, input2, params, targets=None):
    """Plain-JAX reference at the same (bf16 operand / f32 accum) precision."""
    x1 = input1.astype(jnp.bfloat16).astype(jnp.float32)
    x2 = input2.astype(jnp.bfloat16).astype(jnp.float32)
    w1 = params["w1"].astype(jnp.bfloat16).astype(jnp.float32)
    w2 = params["w2"].astype(jnp.bfloat16).astype(jnp.float32)
    r1 = jnp.dot(x1, w1, precision=lax.Precision.HIGHEST) + params["b1"]
    r2 = jnp.dot(x2, w2, precision=lax.Precision.HIGHEST) + params["b2"]
    out = {"output1": r1, "output2": r2}
    if targets is not None:
        out["loss"] = jnp.mean((r1 + r2 - targets) ** 2)
    return out


if __name__ == "__main__":
    # Small but lane-dense shapes (H multiple of 128).  block_b=16 with B=48
    # exercises a 3-step pipelined grid and cross-tile partial-loss reduction.
    B, D1, D2, H = 48, 128, 128, 128

    key = jax.random.PRNGKey(0)
    kp, kx1, kx2, kt = jax.random.split(key, 4)

    params = init_params(kp, D1, D2, H)
    input1 = jax.random.normal(kx1, (B, D1), jnp.float32)
    input2 = jax.random.normal(kx2, (B, D2), jnp.float32)
    targets = jax.random.normal(kt, (B, H), jnp.float32)

    ref = _reference(input1, input2, params, targets=targets)

    # --- training-mode call (with targets -> loss) ---
    out = model_forward(input1, input2, params, targets=targets, block_b=16)
    jax.block_until_ready(out)
    assert out["output1"].shape == (B, H) and out["output2"].shape == (B, H)
    assert jnp.allclose(out["output1"].astype(jnp.float32), ref["output1"],
                        atol=2e-2, rtol=2e-2)   # bf16 output rounding
    assert jnp.allclose(out["output2"].astype(jnp.float32), ref["output2"],
                        atol=2e-2, rtol=2e-2)
    assert jnp.allclose(out["loss"], ref["loss"], atol=1e-3, rtol=1e-3)
    assert out["loss"].shape == ()  # scalar loss, as required by Trainer

    # --- inference-mode call (no targets -> no loss key, no target DMA) ---
    out_inf = model_forward(input1, input2, params)
    jax.block_until_ready(out_inf)
    assert "loss" not in out_inf
    assert jnp.allclose(out_inf["output1"].astype(jnp.float32), ref["output1"],
                        atol=2e-2, rtol=2e-2)
    assert jnp.allclose(out_inf["output2"].astype(jnp.float32), ref["output2"],
                        atol=2e-2, rtol=2e-2)

    # --- ragged batch (partial last tile) validating the in-kernel mask ---
    Br = 29
    out_r = model_forward(input1[:Br], input2[:Br], params,
                          targets=targets[:Br], block_b=16)
    jax.block_until_ready(out_r)
    ref_r = _reference(input1[:Br], input2[:Br], params, targets=targets[:Br])
    assert out_r["output1"].shape == (Br, H)
    assert jnp.allclose(out_r["output1"].astype(jnp.float32), ref_r["output1"],
                        atol=2e-2, rtol=2e-2)
    assert jnp.allclose(out_r["loss"], ref_r["loss"], atol=1e-3, rtol=1e-3)

    # --- f32-output variant (for callers that need full precision) ---
    out_f32 = model_forward(input1, input2, params, targets=targets,
                            block_b=16, out_dtype=jnp.float32)
    jax.block_until_ready(out_f32)
    assert jnp.allclose(out_f32["output1"], ref["output1"], atol=1e-3, rtol=1e-3)
    assert jnp.allclose(out_f32["loss"], ref["loss"], atol=1e-3, rtol=1e-3)

    print("KERNEL_OK")
</pallas_src>

<mosaic_0001>
module attributes {stable_mosaic.version = 11 : i64} {
  func.func @kernel(%arg0: i32, %arg1: memref<16x128xf32, #tpu.memory_space<vmem>>, %arg2: memref<128x128xbf16, #tpu.memory_space<vmem>>, %arg3: memref<1x128xf32, #tpu.memory_space<vmem>>, %arg4: memref<16x128xf32, #tpu.memory_space<vmem>>, %arg5: memref<128x128xbf16, #tpu.memory_space<vmem>>, %arg6: memref<1x128xf32, #tpu.memory_space<vmem>>, %arg7: memref<16x128xf32, #tpu.memory_space<vmem>>, %arg8: memref<16x128xbf16, #tpu.memory_space<vmem>>, %arg9: memref<16x128xbf16, #tpu.memory_space<vmem>>, %arg10: memref<8x128xf32, #tpu.memory_space<vmem>>) attributes {dimension_semantics = [#tpu.dimension_semantics<parallel>], iteration_bounds = array<i64: 3>, scalar_prefetch = 0 : i64, scratch_operands = 0 : i64, tpu.core_type = #tpu.core_type<tc>, window_params = [{transform_indices = @transform_0, window_bounds = array<i64: 16, 128>}, {pipeline_mode = #tpu.pipeline_mode<synchronous>, transform_indices = @transform_1, window_bounds = array<i64: 128, 128>}, {pipeline_mode = #tpu.pipeline_mode<synchronous>, transform_indices = @transform_2, window_bounds = array<i64: 1, 128>}, {transform_indices = @transform_3, window_bounds = array<i64: 16, 128>}, {pipeline_mode = #tpu.pipeline_mode<synchronous>, transform_indices = @transform_4, window_bounds = array<i64: 128, 128>}, {pipeline_mode = #tpu.pipeline_mode<synchronous>, transform_indices = @transform_5, window_bounds = array<i64: 1, 128>}, {transform_indices = @transform_6, window_bounds = array<i64: 16, 128>}, {transform_indices = @transform_7, window_bounds = array<i64: 16, 128>}, {transform_indices = @transform_8, window_bounds = array<i64: 16, 128>}, {transform_indices = @transform_9, window_bounds = array<i64: 8, 128>}]} {
    %c0 = arith.constant 0 : index
    %c0_0 = arith.constant 0 : index
    %0 = vector.load %arg1[%c0, %c0_0] : memref<16x128xf32, #tpu.memory_space<vmem>>, vector<16x128xf32>
    %1 = arith.truncf %0 : vector<16x128xf32> to vector<16x128xbf16>
    %c0_1 = arith.constant 0 : index
    %c0_2 = arith.constant 0 : index
    %2 = vector.load %arg2[%c0_1, %c0_2] : memref<128x128xbf16, #tpu.memory_space<vmem>>, vector<128x128xbf16>
    %cst = arith.constant dense<0.000000e+00> : vector<16x128xf32>
    %3 = tpu.matmul %1, %2, %cst {dimension_numbers = #tpu.dot_dimension_numbers<[1], [0], [0], [1], [0, 0, 1, 1], [], []>} : vector<16x128xbf16>, vector<128x128xbf16>, vector<16x128xf32> -> vector<16x128xf32>
    %c0_3 = arith.constant 0 : index
    %c0_4 = arith.constant 0 : index
    %4 = vector.load %arg3[%c0_3, %c0_4] : memref<1x128xf32, #tpu.memory_space<vmem>>, vector<1x128xf32>
    %5 = vector.broadcast %4 : vector<1x128xf32> to vector<16x128xf32>
    %6 = arith.addf %3, %5 : vector<16x128xf32>
    %c0_5 = arith.constant 0 : index
    %c0_6 = arith.constant 0 : index
    %7 = vector.load %arg4[%c0_5, %c0_6] : memref<16x128xf32, #tpu.memory_space<vmem>>, vector<16x128xf32>
    %8 = arith.truncf %7 : vector<16x128xf32> to vector<16x128xbf16>
    %c0_7 = arith.constant 0 : index
    %c0_8 = arith.constant 0 : index
    %9 = vector.load %arg5[%c0_7, %c0_8] : memref<128x128xbf16, #tpu.memory_space<vmem>>, vector<128x128xbf16>
    %cst_9 = arith.constant dense<0.000000e+00> : vector<16x128xf32>
    %10 = tpu.matmul %8, %9, %cst_9 {dimension_numbers = #tpu.dot_dimension_numbers<[1], [0], [0], [1], [0, 0, 1, 1], [], []>} : vector<16x128xbf16>, vector<128x128xbf16>, vector<16x128xf32> -> vector<16x128xf32>
    %c0_10 = arith.constant 0 : index
    %c0_11 = arith.constant 0 : index
    %11 = vector.load %arg6[%c0_10, %c0_11] : memref<1x128xf32, #tpu.memory_space<vmem>>, vector<1x128xf32>
    %12 = vector.broadcast %11 : vector<1x128xf32> to vector<16x128xf32>
    %13 = arith.addf %10, %12 : vector<16x128xf32>
    %14 = arith.truncf %6 : vector<16x128xf32> to vector<16x128xbf16>
    %c0_12 = arith.constant 0 : index
    %c0_13 = arith.constant 0 : index
    %15 = vector.load %arg8[%c0_12, %c0_13] : memref<16x128xbf16, #tpu.memory_space<vmem>>, vector<16x128xbf16>
    tpu.vector_store %arg8[%c0_12, %c0_13], %14 {strides = array<i32>} : memref<16x128xbf16, #tpu.memory_space<vmem>>, vector<16x128xbf16>,
    %16 = arith.truncf %13 : vector<16x128xf32> to vector<16x128xbf16>
    %c0_14 = arith.constant 0 : index
    %c0_15 = arith.constant 0 : index
    %17 = vector.load %arg9[%c0_14, %c0_15] : memref<16x128xbf16, #tpu.memory_space<vmem>>, vector<16x128xbf16>
    tpu.vector_store %arg9[%c0_14, %c0_15], %16 {strides = array<i32>} : memref<16x128xbf16, #tpu.memory_space<vmem>>, vector<16x128xbf16>,
    %18 = arith.addf %6, %13 : vector<16x128xf32>
    %c0_16 = arith.constant 0 : index
    %c0_17 = arith.constant 0 : index
    %19 = vector.load %arg7[%c0_16, %c0_17] : memref<16x128xf32, #tpu.memory_space<vmem>>, vector<16x128xf32>
    %20 = arith.subf %18, %19 : vector<16x128xf32>
    %21 = arith.mulf %20, %20 : vector<16x128xf32>
    %22 = vector.shape_cast %21 : vector<16x128xf32> to vector<2x8x128xf32>
    %cst_18 = arith.constant dense<0.000000e+00> : vector<8x128xf32>
    %23 = vector.multi_reduction <add>, %22, %cst_18 [0] : vector<2x8x128xf32> to vector<8x128xf32>
    %c0_19 = arith.constant 0 : index
    %c0_20 = arith.constant 0 : index
    %24 = vector.load %arg10[%c0_19, %c0_20] : memref<8x128xf32, #tpu.memory_space<vmem>>, vector<8x128xf32>
    tpu.vector_store %arg10[%c0_19, %c0_20], %23 {strides = array<i32>} : memref<8x128xf32, #tpu.memory_space<vmem>>, vector<8x128xf32>,
    return
  }
  func.func @transform_0(%arg0: i32) -> (i32, i32) {
    %c0_i32 = arith.constant 0 : i32
    %c0_i32_0 = arith.constant 0 : i32
    return %arg0, %c0_i32 : i32, i32
  }
  func.func @transform_1(%arg0: i32) -> (i32, i32) {
    %c0_i32 = arith.constant 0 : i32
    %c0_i32_0 = arith.constant 0 : i32
    %c0_i32_1 = arith.constant 0 : i32
    return %c0_i32, %c0_i32_0 : i32, i32
  }
  func.func @transform_2(%arg0: i32) -> (i32, i32) {
    %c0_i32 = arith.constant 0 : i32
    %c0_i32_0 = arith.constant 0 : i32
    %c0_i32_1 = arith.constant 0 : i32
    return %c0_i32, %c0_i32_0 : i32, i32
  }
  func.func @transform_3(%arg0: i32) -> (i32, i32) {
    %c0_i32 = arith.constant 0 : i32
    %c0_i32_0 = arith.constant 0 : i32
    return %arg0, %c0_i32 : i32, i32
  }
  func.func @transform_4(%arg0: i32) -> (i32, i32) {
    %c0_i32 = arith.constant 0 : i32
    %c0_i32_0 = arith.constant 0 : i32
    %c0_i32_1 = arith.constant 0 : i32
    return %c0_i32, %c0_i32_0 : i32, i32
  }
  func.func @transform_5(%arg0: i32) -> (i32, i32) {
    %c0_i32 = arith.constant 0 : i32
    %c0_i32_0 = arith.constant 0 : i32
    %c0_i32_1 = arith.constant 0 : i32
    return %c0_i32, %c0_i32_0 : i32, i32
  }
  func.func @transform_6(%arg0: i32) -> (i32, i32) {
    %c0_i32 = arith.constant 0 : i32
    %c0_i32_0 = arith.constant 0 : i32
    return %arg0, %c0_i32 : i32, i32
  }
  func.func @transform_7(%arg0: i32) -> (i32, i32) {
    %c0_i32 = arith.constant 0 : i32
    %c0_i32_0 = arith.constant 0 : i32
    return %arg0, %c0_i32 : i32, i32
  }
  func.func @transform_8(%arg0: i32) -> (i32, i32) {
    %c0_i32 = arith.constant 0 : i32
    %c0_i32_0 = arith.constant 0 : i32
    return %arg0, %c0_i32 : i32, i32
  }
  func.func @transform_9(%arg0: i32) -> (i32, i32) {
    %c0_i32 = arith.constant 0 : i32
    %c0_i32_0 = arith.constant 0 : i32
    return %arg0, %c0_i32 : i32, i32
  }
}

</mosaic_0001>

<llo_original>
// kernel: tpu_custom_call.1
$region0: #{tpu_custom_call.1}
  #allocation0 [shape = 'u32[]', space=smem, size = 0x4, offset = 0x4, fixed_abs, tag = 'smem constant byte address 0x4 - core index']
  #allocation1 [shape = 'u32[144,128]{1,0:T(1,128)}', space=vmem, size = 0x12000, scoped, tag = 'internal scratch']
  %s0 = inlined_call_operand.hbm [shape: f32[48,128], index: 0, kind: input, shape index: {}]
  %s1 = inlined_call_operand.hbm [shape: bf16[128,128], index: 1, kind: input, shape index: {}]
  %s2 = inlined_call_operand.vmem [shape: f32[1,128], index: 2, kind: input, shape index: {}]
  %s3 = inlined_call_operand.hbm [shape: f32[48,128], index: 3, kind: input, shape index: {}]
  %s4 = inlined_call_operand.hbm [shape: bf16[128,128], index: 4, kind: input, shape index: {}]
  %s5 = inlined_call_operand.vmem [shape: f32[1,128], index: 5, kind: input, shape index: {}]
  %s6 = inlined_call_operand.hbm [shape: f32[48,128], index: 6, kind: input, shape index: {}]
  %s7 = inlined_call_operand.hbm [shape: bf16[48,128], index: 7, kind: output, shape index: {0}]
  %s8 = inlined_call_operand.hbm [shape: bf16[48,128], index: 8, kind: output, shape index: {1}]
  %s9 = inlined_call_operand.hbm [shape: f32[24,128], index: 9, kind: output, shape index: {2}]
  %10 = xla_tuple %s7, %s8, %s9
  %s11 = sld [smem:[#allocation0]]
  $region97: #{tpu_custom_call.1} parent=0
    _
  %s13 = ssub.s32 1, %s11
  %s14 = scalar_select 0, %s13, %s11
  $region1: #{tpu_custom_call.1} parent=0
    #allocation2 [shape = 'u8[16384]{0}', space=vmem, size = 0x4000, scoped, tag = 'input window, operand 0']
    #allocation3 [shape = 's32[2]{0}', space=sflag, size = 0x8, scoped, tag = 'scoped memory for tpu_custom_call.1']
    #allocation4 [shape = 's32[2]{0}', space=sflag, size = 0x8, scoped, tag = 'scoped memory for tpu_custom_call.1']
    #allocation5 [shape = 'u8[32768]{0}', space=vmem, size = 0x8000, scoped, tag = 'input window, operand 1, single buffered']
    #allocation6 [shape = 's32[1]{0}', space=sflag, size = 0x4, scoped, tag = 'scoped memory for tpu_custom_call.1']
    #allocation7 [shape = 'u8[16384]{0}', space=vmem, size = 0x4000, scoped, tag = 'input window, operand 3']
    #allocation8 [shape = 'u8[32768]{0}', space=vmem, size = 0x8000, scoped, tag = 'input window, operand 4, single buffered']
    #allocation9 [shape = 'u8[16384]{0}', space=vmem, size = 0x4000, scoped, tag = 'input window, operand 6']
    #allocation10 [shape = 's32[2]{0}', space=sflag, size = 0x8, scoped, tag = 'scoped memory for tpu_custom_call.1']
    #allocation11 [shape = 'u8[8192]{0}', space=vmem, size = 0x2000, scoped, tag = 'output window, operand 0']
    #allocation12 [shape = 'u8[8192]{0}', space=vmem, size = 0x2000, scoped, tag = 'output window, operand 1']
    #allocation13 [shape = 's32[2]{0}', space=sflag, size = 0x8, scoped, tag = 'scoped memory for tpu_custom_call.1']
    #allocation14 [shape = 'u8[8192]{0}', space=vmem, size = 0x2000, scoped, tag = 'output window, operand 2']
    %15 = vsyncpa [#allocation3], 0
    %s16 = scalar_lea.sflag [#allocation3], 1
    %17 = vsyncpa %s16, 0
    %18 = vsyncpa [#allocation6], 0
    %19 = vsyncpa [#allocation10], 0
    %s20 = scalar_lea.sflag [#allocation10], 1
    %21 = vsyncpa %s20, 0
    %22 = vsyncpa [#allocation4], 0
    %s23 = scalar_lea.sflag [#allocation4], 1
    %24 = vsyncpa %s23, 0
    %25 = vsyncpa [#allocation13], 0
    %s26 = scalar_lea.sflag [#allocation13], 1
    %27 = vsyncpa %s26, 0
    loop: start=0, step=1, limit=5
    $region2: #{tpu_custom_call.1} parent=1 // loop_pre_header
      _
    $region3: #{tpu_custom_call.1} parent=1 // loop_header
      %s29 = sphi 0, %s33
      %p30 = scmp.ge.s32.totalorder %s29, 5
      %s39 = sphi 0, %s41
      %s42 = sphi 0, %s39
      %s43 = sphi 0, %s42
      %s59 = sphi 0, %s43
      %s63 = sphi 0, %s63
      %s65 = sphi 0, %s63
      %s66 = sphi 0, %s65
      %s80 = sphi 0, %s66
      %s84 = sphi 0, %s84
      %s86 = sphi 0, %s84
      %s87 = sphi 0, %s86
      %s101 = sphi 0, %s87
      %s107 = sphi 0, %s109
      %s110 = sphi 0, %s107
      %s111 = sphi 0, %s110
      %s127 = sphi 0, %s111
      %s131 = sphi 0, %s131
      %s133 = sphi 0, %s131
      %s134 = sphi 0, %s133
      %s148 = sphi 0, %s134
      %s152 = sphi 0, %s152
      %s154 = sphi 0, %s152
      %s155 = sphi 0, %s154
      %s169 = sphi 0, %s155
      %s175 = sphi 0, %s177
      %s178 = sphi 0, %s175
      %s179 = sphi 0, %s178
      %s195 = sphi 0, %s179
      %s201 = sphi 0, %s203
      %s204 = sphi 0, %s201
      %s205 = sphi 0, %s204
      %s221 = sphi 0, %s205
      %s227 = sphi 0, %s229
      %s230 = sphi 0, %s227
      %s231 = sphi 0, %s230
      %s247 = sphi 0, %s231
      %s253 = sphi 0, %s255
      %s256 = sphi 0, %s253
      %s257 = sphi 0, %s256
      %s273 = sphi 0, %s257
    $region4: #{tpu_custom_call.1} parent=1 // loop_header_branch
      %32 = sbr.rel (%p30) target = $region8
    $region5: #{tpu_custom_call.1} parent=1 // loop_body
      %s34 = ssub.s32 %s29, 1
      %s35 = ssub.s32 %s29, 2
      %s36 = sadd.s32 %s29, 1
      %s37 = ssub.s32 %s29, %s36
      %p38 = scmp.eq.s32.totalorder %s37, 0
      %s40 = sadd.s32 %s39, 1
      %s41 = scalar_select %p38, %s39, %s40
      %p44 = pneg %p38
      %p45 = scmp.eq.s32.totalorder %s29, 2
      %p46 = por %p44, %p45
      %p47 = scmp.ne.s32.totalorder %s39, %s42
      %p48 = scmp.eq.s32.totalorder %s29, 0
      %p49 = por %p47, %p48
      %p50 = scmp.ne.s32.totalorder %s39, %s42
      %p51 = scmp.eq.s32.totalorder %s34, 2
      %p52 = por %p50, %p51
      %p53 = scmp.ne.s32.totalorder %s42, %s43
      %p54 = scmp.eq.s32.totalorder %s34, 0
      %p55 = por %p53, %p54
      %p56 = scmp.ne.s32.totalorder %s42, %s43
      %p57 = scmp.eq.s32.totalorder %s35, 2
      %p58 = por %p56, %p57
      %p60 = scmp.ne.s32.totalorder %s43, %s59
      %p61 = scmp.eq.s32.totalorder %s35, 0
      %p62 = por %p60, %p61
      %s64 = sadd.s32 %s63, 1
      %p67 = scmp.eq.s32.totalorder %s29, 2
      %p68 = scmp.ne.s32.totalorder %s63, %s65
      %p69 = scmp.eq.s32.totalorder %s29, 0
      %p70 = por %p68, %p69
      %p71 = scmp.ne.s32.totalorder %s63, %s65
      %p72 = scmp.eq.s32.totalorder %s34, 2
      %p73 = por %p71, %p72
      %p74 = scmp.ne.s32.totalorder %s65, %s66
      %p75 = scmp.eq.s32.totalorder %s34, 0
      %p76 = por %p74, %p75
      %p77 = scmp.ne.s32.totalorder %s65, %s66
      %p78 = scmp.eq.s32.totalorder %s35, 2
      %p79 = por %p77, %p78
      %p81 = scmp.ne.s32.totalorder %s66, %s80
      %p82 = scmp.eq.s32.totalorder %s35, 0
      %p83 = por %p81, %p82
      %s85 = sadd.s32 %s84, 1
      %p88 = scmp.eq.s32.totalorder %s29, 2
      %p89 = scmp.ne.s32.totalorder %s84, %s86
      %p90 = scmp.eq.s32.totalorder %s29, 0
      %p91 = por %p89, %p90
      %p92 = scmp.ne.s32.totalorder %s84, %s86
      %p93 = scmp.eq.s32.totalorder %s34, 2
      %p94 = por %p92, %p93
      %p95 = scmp.ne.s32.totalorder %s86, %s87
      %p96 = scmp.eq.s32.totalorder %s34, 0
      %p97 = por %p95, %p96
      %p98 = scmp.ne.s32.totalorder %s86, %s87
      %p99 = scmp.eq.s32.totalorder %s35, 2
      %p100 = por %p98, %p99
      %p102 = scmp.ne.s32.totalorder %s87, %s101
      %p103 = scmp.eq.s32.totalorder %s35, 0
      %p104 = por %p102, %p103
      %s105 = ssub.s32 %s29, %s36
      %p106 = scmp.eq.s32.totalorder %s105, 0
      %s108 = sadd.s32 %s107, 1
      %s109 = scalar_select %p106, %s107, %s108
      %p112 = pneg %p106
      %p113 = scmp.eq.s32.totalorder %s29, 2
      %p114 = por %p112, %p113
      %p115 = scmp.ne.s32.totalorder %s107, %s110
      %p116 = scmp.eq.s32.totalorder %s29, 0
      %p117 = por %p115, %p116
      %p118 = scmp.ne.s32.totalorder %s107, %s110
      %p119 = scmp.eq.s32.totalorder %s34, 2
      %p120 = por %p118, %p119
      %p121 = scmp.ne.s32.totalorder %s110, %s111
      %p122 = scmp.eq.s32.totalorder %s34, 0
      %p123 = por %p121, %p122
      %p124 = scmp.ne.s32.totalorder %s110, %s111
      %p125 = scmp.eq.s32.totalorder %s35, 2
      %p126 = por %p124, %p125
      %p128 = scmp.ne.s32.totalorder %s111, %s127
      %p129 = scmp.eq.s32.totalorder %s35, 0
      %p130 = por %p128, %p129
      %s132 = sadd.s32 %s131, 1
      %p135 = scmp.eq.s32.totalorder %s29, 2
      %p136 = scmp.ne.s32.totalorder %s131, %s133
      %p137 = scmp.eq.s32.totalorder %s29, 0
      %p138 = por %p136, %p137
      %p139 = scmp.ne.s32.totalorder %s131, %s133
      %p140 = scmp.eq.s32.totalorder %s34, 2
      %p141 = por %p139, %p140
      %p142 = scmp.ne.s32.totalorder %s133, %s134
      %p143 = scmp.eq.s32.totalorder %s34, 0
      %p144 = por %p142, %p143
      %p145 = scmp.ne.s32.totalorder %s133, %s134
      %p146 = scmp.eq.s32.totalorder %s35, 2
      %p147 = por %p145, %p146
      %p149 = scmp.ne.s32.totalorder %s134, %s148
      %p150 = scmp.eq.s32.totalorder %s35, 0
      %p151 = por %p149, %p150
      %s153 = sadd.s32 %s152, 1
      %p156 = scmp.eq.s32.totalorder %s29, 2
      %p157 = scmp.ne.s32.totalorder %s152, %s154
      %p158 = scmp.eq.s32.totalorder %s29, 0
      %p159 = por %p157, %p158
      %p160 = scmp.ne.s32.totalorder %s152, %s154
      %p161 = scmp.eq.s32.totalorder %s34, 2
      %p162 = por %p160, %p161
      %p163 = scmp.ne.s32.totalorder %s154, %s155
      %p164 = scmp.eq.s32.totalorder %s34, 0
      %p165 = por %p163, %p164
      %p166 = scmp.ne.s32.totalorder %s154, %s155
      %p167 = scmp.eq.s32.totalorder %s35, 2
      %p168 = por %p166, %p167
      %p170 = scmp.ne.s32.totalorder %s155, %s169
      %p171 = scmp.eq.s32.totalorder %s35, 0
      %p172 = por %p170, %p171
      %s173 = ssub.s32 %s29, %s36
      %p174 = scmp.eq.s32.totalorder %s173, 0
      %s176 = sadd.s32 %s175, 1
      %s177 = scalar_select %p174, %s175, %s176
      %p180 = pneg %p174
      %p181 = scmp.eq.s32.totalorder %s29, 2
      %p182 = por %p180, %p181
      %p183 = scmp.ne.s32.totalorder %s175, %s178
      %p184 = scmp.eq.s32.totalorder %s29, 0
      %p185 = por %p183, %p184
      %p186 = scmp.ne.s32.totalorder %s175, %s178
      %p187 = scmp.eq.s32.totalorder %s34, 2
      %p188 = por %p186, %p187
      %p189 = scmp.ne.s32.totalorder %s178, %s179
      %p190 = scmp.eq.s32.totalorder %s34, 0
      %p191 = por %p189, %p190
      %p192 = scmp.ne.s32.totalorder %s178, %s179
      %p193 = scmp.eq.s32.totalorder %s35, 2
      %p194 = por %p192, %p193
      %p196 = scmp.ne.s32.totalorder %s179, %s195
      %p197 = scmp.eq.s32.totalorder %s35, 0
      %p198 = por %p196, %p197
      %s199 = ssub.s32 %s29, %s36
      %p200 = scmp.eq.s32.totalorder %s199, 0
      %s202 = sadd.s32 %s201, 1
      %s203 = scalar_select %p200, %s201, %s202
      %p206 = pneg %p200
      %p207 = scmp.eq.s32.totalorder %s29, 2
      %p208 = por %p206, %p207
      %p209 = scmp.ne.s32.totalorder %s201, %s204
      %p210 = scmp.eq.s32.totalorder %s29, 0
      %p211 = por %p209, %p210
      %p212 = scmp.ne.s32.totalorder %s201, %s204
      %p213 = scmp.eq.s32.totalorder %s34, 2
      %p214 = por %p212, %p213
      %p215 = scmp.ne.s32.totalorder %s204, %s205
      %p216 = scmp.eq.s32.totalorder %s34, 0
      %p217 = por %p215, %p216
      %p218 = scmp.ne.s32.totalorder %s204, %s205
      %p219 = scmp.eq.s32.totalorder %s35, 2
      %p220 = por %p218, %p219
      %p222 = scmp.ne.s32.totalorder %s205, %s221
      %p223 = scmp.eq.s32.totalorder %s35, 0
      %p224 = por %p222, %p223
      %s225 = ssub.s32 %s29, %s36
      %p226 = scmp.eq.s32.totalorder %s225, 0
      %s228 = sadd.s32 %s227, 1
      %s229 = scalar_select %p226, %s227, %s228
      %p232 = pneg %p226
      %p233 = scmp.eq.s32.totalorder %s29, 2
      %p234 = por %p232, %p233
      %p235 = scmp.ne.s32.totalorder %s227, %s230
      %p236 = scmp.eq.s32.totalorder %s29, 0
      %p237 = por %p235, %p236
      %p238 = scmp.ne.s32.totalorder %s227, %s230
      %p239 = scmp.eq.s32.totalorder %s34, 2
      %p240 = por %p238, %p239
      %p241 = scmp.ne.s32.totalorder %s230, %s231
      %p242 = scmp.eq.s32.totalorder %s34, 0
      %p243 = por %p241, %p242
      %p244 = scmp.ne.s32.totalorder %s230, %s231
      %p245 = scmp.eq.s32.totalorder %s35, 2
      %p246 = por %p244, %p245
      %p248 = scmp.ne.s32.totalorder %s231, %s247
      %p249 = scmp.eq.s32.totalorder %s35, 0
      %p250 = por %p248, %p249
      %s251 = ssub.s32 %s29, %s36
      %p252 = scmp.eq.s32.totalorder %s251, 0
      %s254 = sadd.s32 %s253, 1
      %s255 = scalar_select %p252, %s253, %s254
      %p258 = pneg %p252
      %p259 = scmp.eq.s32.totalorder %s29, 2
      %p260 = por %p258, %p259
      %p261 = scmp.ne.s32.totalorder %s253, %s256
      %p262 = scmp.eq.s32.totalorder %s29, 0
      %p263 = por %p261, %p262
      %p264 = scmp.ne.s32.totalorder %s253, %s256
      %p265 = scmp.eq.s32.totalorder %s34, 2
      %p266 = por %p264, %p265
      %p267 = scmp.ne.s32.totalorder %s256, %s257
      %p268 = scmp.eq.s32.totalorder %s34, 0
      %p269 = por %p267, %p268
      %p270 = scmp.ne.s32.totalorder %s256, %s257
      %p271 = scmp.eq.s32.totalorder %s35, 2
      %p272 = por %p270, %p271
      %p274 = scmp.ne.s32.totalorder %s257, %s273
      %p275 = scmp.eq.s32.totalorder %s35, 0
      %p276 = por %p274, %p275
      %p277 = scmp.le.s32.totalorder 1, %s29
      %p278 = scmp.lt.s32.totalorder %s29, 4
      %p279 = pnand %p277, %p278
      %p280 = pneg %p279
      // Predicated region
      $region9: #{tpu_custom_call.1} parent=5 // pred_check
        _
      $region10: #{tpu_custom_call.1} parent=5 // pred_check_branch
        %282 = sbr.rel (%p279) target = $region12
      $region11: #{tpu_custom_call.1} parent=5 // pred_region
        %s283 = ssub.s32 %s29, 1
        // Predicated region
        $region13: #{tpu_custom_call.1} parent=11 // pred_check
          %p284 = pneg %p76
        $region14: #{tpu_custom_call.1} parent=11 // pred_check_branch
          %286 = sbr.rel (%p284) target = $region16
        $region15: #{tpu_custom_call.1} parent=11 // pred_region
          %s288 = ssub.s32 1024, 1024
          %289 = vsyncadd [#allocation6], %s288
          %s290 = sshll.u32 [#allocation5], 4
          %s291 = int_to_ptr.vmem [resolvable:$true] %s290
          %296 = dma.hbm_to_vmem [thread:$0]  %s1, 1024, %s291, [#allocation6], 64, 64, 4
        $region16: #{tpu_custom_call.1} parent=11 // pred_fallthru
          _
        // Predicated region
        $region17: #{tpu_custom_call.1} parent=11 // pred_check
          %p297 = pneg %p97
        $region18: #{tpu_custom_call.1} parent=11 // pred_check_branch
          %299 = sbr.rel (%p297) target = $region20
        $region19: #{tpu_custom_call.1} parent=11 // pred_region
          _
        $region20: #{tpu_custom_call.1} parent=11 // pred_fallthru
          _
        // Predicated region
        $region21: #{tpu_custom_call.1} parent=11 // pred_check
          %p300 = pneg %p144
        $region22: #{tpu_custom_call.1} parent=11 // pred_check_branch
          %302 = sbr.rel (%p300) target = $region24
        $region23: #{tpu_custom_call.1} parent=11 // pred_region
          %s304 = ssub.s32 1024, 1024
          %305 = vsyncadd [#allocation6], %s304
          %s306 = sshll.u32 [#allocation8], 4
          %s307 = int_to_ptr.vmem [resolvable:$true] %s306
          %312 = dma.hbm_to_vmem [thread:$0]  %s4, 1024, %s307, [#allocation6], 64, 64, 4
        $region24: #{tpu_custom_call.1} parent=11 // pred_fallthru
          _
        // Predicated region
        $region25: #{tpu_custom_call.1} parent=11 // pred_check
          %p313 = pneg %p165
        $region26: #{tpu_custom_call.1} parent=11 // pred_check_branch
          %315 = sbr.rel (%p313) target = $region28
        $region27: #{tpu_custom_call.1} parent=11 // pred_region
          _
        $region28: #{tpu_custom_call.1} parent=11 // pred_fallthru
          _
      $region12: #{tpu_custom_call.1} parent=5 // pred_fallthru
        _
      %p316 = scmp.lt.s32.totalorder %s29, 3
      // Predicated region
      $region29: #{tpu_custom_call.1} parent=5 // pred_check
        %p317 = pneg %p316
      $region30: #{tpu_custom_call.1} parent=5 // pred_check_branch
        %319 = sbr.rel (%p317) target = $region32
      $region31: #{tpu_custom_call.1} parent=5 // pred_region
        // Predicated region
        $region33: #{tpu_custom_call.1} parent=31 // pred_check
          %p320 = pneg %p49
        $region34: #{tpu_custom_call.1} parent=31 // pred_check_branch
          %322 = sbr.rel (%p320) target = $region36
        $region35: #{tpu_custom_call.1} parent=31 // pred_region
          %s323 = sand.u32 %s29, 1
          %s324 = scalar_lea.sflag [#allocation3], %s323
          %s325 = sand.u32 %s39, 1
          %s326 = smul.addr %s325, 16
          %s327 = scalar_lea.vmem [#allocation2], %s326
          %s328 = smul.u32 2, %s29
          %s330 = ssub.s32 256, 256
          %331 = vsyncadd %s324, %s330
          %s332 = smul.addr %s328, 128
          %s333 = scalar_lea.hbm %s0, %s332
          %s334 = sshll.u32 %s327, 4
          %s335 = int_to_ptr.vmem [resolvable:$true] %s334
          %340 = dma.hbm_to_vmem [thread:$0]  %s333, 256, %s335, %s324, 128, 128, 8
        $region36: #{tpu_custom_call.1} parent=31 // pred_fallthru
          _
        // Predicated region
        $region37: #{tpu_custom_call.1} parent=31 // pred_check
          %p341 = pneg %p117
        $region38: #{tpu_custom_call.1} parent=31 // pred_check_branch
          %343 = sbr.rel (%p341) target = $region40
        $region39: #{tpu_custom_call.1} parent=31 // pred_region
          %s344 = sand.u32 %s29, 1
          %s345 = scalar_lea.sflag [#allocation3], %s344
          %s346 = sand.u32 %s107, 1
          %s347 = smul.addr %s346, 16
          %s348 = scalar_lea.vmem [#allocation7], %s347
          %s349 = smul.u32 2, %s29
          %s351 = ssub.s32 256, 256
          %352 = vsyncadd %s345, %s351
          %s353 = smul.addr %s349, 128
          %s354 = scalar_lea.hbm %s3, %s353
          %s355 = sshll.u32 %s348, 4
          %s356 = int_to_ptr.vmem [resolvable:$true] %s355
          %361 = dma.hbm_to_vmem [thread:$0]  %s354, 256, %s356, %s345, 128, 128, 8
        $region40: #{tpu_custom_call.1} parent=31 // pred_fallthru
          _
        // Predicated region
        $region41: #{tpu_custom_call.1} parent=31 // pred_check
          %p362 = pneg %p185
        $region42: #{tpu_custom_call.1} parent=31 // pred_check_branch
          %364 = sbr.rel (%p362) target = $region44
        $region43: #{tpu_custom_call.1} parent=31 // pred_region
          %s365 = sand.u32 %s175, 1
          %s366 = scalar_lea.sflag [#allocation10], %s365
          %s367 = sand.u32 %s175, 1
          %s368 = smul.addr %s367, 16
          %s369 = scalar_lea.vmem [#allocation9], %s368
          %s370 = smul.u32 2, %s29
          %s372 = ssub.s32 256, 256
          %373 = vsyncadd %s366, %s372
          %s374 = smul.addr %s370, 128
          %s375 = scalar_lea.hbm %s6, %s374
          %s376 = sshll.u32 %s369, 4
          %s377 = int_to_ptr.vmem [resolvable:$true] %s376
          %382 = dma.hbm_to_vmem [thread:$0]  %s375, 256, %s377, %s366, 128, 128, 8
        $region44: #{tpu_custom_call.1} parent=31 // pred_fallthru
          _
      $region32: #{tpu_custom_call.1} parent=5 // pred_fallthru
        _
      %p383 = scmp.le.s32.totalorder 1, %s29
      %p384 = scmp.lt.s32.totalorder %s29, 4
      %p385 = pnand %p383, %p384
      %p386 = pneg %p385
      // Predicated region
      $region45: #{tpu_custom_call.1} parent=5 // pred_check
        _
      $region46: #{tpu_custom_call.1} parent=5 // pred_check_branch
        %388 = sbr.rel (%p385) target = $region48
      $region47: #{tpu_custom_call.1} parent=5 // pred_region
        %s389 = ssub.s32 %s29, 1
        %s390 = sand.u32 %s34, 1
        %s391 = scalar_lea.sflag [#allocation3], %s390
        %s392 = sand.u32 %s42, 1
        %s393 = smul.addr %s392, 16
        %s394 = scalar_lea.vmem [#allocation2], %s393
        // Predicated region
        $region49: #{tpu_custom_call.1} parent=47 // pred_check
          %p395 = pneg %p55
        $region50: #{tpu_custom_call.1} parent=47 // pred_check_branch
          %397 = sbr.rel (%p395) target = $region52
        $region51: #{tpu_custom_call.1} parent=47 // pred_region
          %398 = dma.done %s391, 256
        $region52: #{tpu_custom_call.1} parent=47 // pred_fallthru
          _
        // Predicated region
        $region53: #{tpu_custom_call.1} parent=47 // pred_check
          %p399 = pneg %p76
        $region54: #{tpu_custom_call.1} parent=47 // pred_check_branch
          %401 = sbr.rel (%p399) target = $region56
        $region55: #{tpu_custom_call.1} parent=47 // pred_region
          %402 = dma.done [#allocation6], 1024
        $region56: #{tpu_custom_call.1} parent=47 // pred_fallthru
          _
        %s403 = sand.u32 %s34, 1
        %s404 = scalar_lea.sflag [#allocation3], %s403
        %s405 = sand.u32 %s110, 1
        %s406 = smul.addr %s405, 16
        %s407 = scalar_lea.vmem [#allocation7], %s406
        // Predicated region
        $region57: #{tpu_custom_call.1} parent=47 // pred_check
          %p408 = pneg %p123
        $region58: #{tpu_custom_call.1} parent=47 // pred_check_branch
          %410 = sbr.rel (%p408) target = $region60
        $region59: #{tpu_custom_call.1} parent=47 // pred_region
          %411 = dma.done %s404, 256
        $region60: #{tpu_custom_call.1} parent=47 // pred_fallthru
          _
        // Predicated region
        $region61: #{tpu_custom_call.1} parent=47 // pred_check
          %p412 = pneg %p144
        $region62: #{tpu_custom_call.1} parent=47 // pred_check_branch
          %414 = sbr.rel (%p412) target = $region64
        $region63: #{tpu_custom_call.1} parent=47 // pred_region
          %415 = dma.done [#allocation6], 1024
        $region64: #{tpu_custom_call.1} parent=47 // pred_fallthru
          _
        %s416 = sand.u32 %s178, 1
        %s417 = scalar_lea.sflag [#allocation10], %s416
        %s418 = sand.u32 %s178, 1
        %s419 = smul.addr %s418, 16
        %s420 = scalar_lea.vmem [#allocation9], %s419
        // Predicated region
        $region65: #{tpu_custom_call.1} parent=47 // pred_check
          %p421 = pneg %p191
        $region66: #{tpu_custom_call.1} parent=47 // pred_check_branch
          %423 = sbr.rel (%p421) target = $region68
        $region67: #{tpu_custom_call.1} parent=47 // pred_region
          %424 = dma.done %s417, 256
        $region68: #{tpu_custom_call.1} parent=47 // pred_fallthru
          _
        %s425 = sand.u32 %s34, 1
        %s426 = scalar_lea.sflag [#allocation3], %s425
        %s427 = sand.u32 %s42, 1
        %s428 = smul.addr %s427, 16
        %s429 = scalar_lea.vmem [#allocation2], %s428
        %p430 = pneg %p55
        %p431 = pneg %p52
        %p432 = pneg %p76
        %p433 = pneg %p73
        %p434 = pneg %p97
        %p435 = pneg %p94
        %s436 = sand.u32 %s34, 1
        %s437 = scalar_lea.sflag [#allocation3], %s436
        %s438 = sand.u32 %s110, 1
        %s439 = smul.addr %s438, 16
        %s440 = scalar_lea.vmem [#allocation7], %s439
        %p441 = pneg %p123
        %p442 = pneg %p120
        %p443 = pneg %p144
        %p444 = pneg %p141
        %p445 = pneg %p165
        %p446 = pneg %p162
        %s447 = sand.u32 %s178, 1
        %s448 = scalar_lea.sflag [#allocation10], %s447
        %s449 = sand.u32 %s178, 1
        %s450 = smul.addr %s449, 16
        %s451 = scalar_lea.vmem [#allocation9], %s450
        %p452 = pneg %p191
        %p453 = pneg %p188
        %p454 = pneg %p217
        %p455 = pneg %p214
        %s456 = sand.u32 %s204, 1
        %s457 = scalar_lea.sflag [#allocation4], %s456
        %s458 = sand.u32 %s204, 1
        %s459 = smul.addr %s458, 8
        %s460 = scalar_lea.vmem [#allocation11], %s459
        %p461 = pneg %p243
        %p462 = pneg %p240
        %s463 = sand.u32 %s34, 1
        %s464 = scalar_lea.sflag [#allocation13], %s463
        %s465 = sand.u32 %s230, 1
        %s466 = smul.addr %s465, 8
        %s467 = scalar_lea.vmem [#allocation12], %s466
        %p468 = pneg %p269
        %p469 = pneg %p266
        %s470 = sand.u32 %s34, 1
        %s471 = scalar_lea.sflag [#allocation13], %s470
        %s472 = sand.u32 %s256, 1
        %s473 = smul.addr %s472, 8
        %s474 = scalar_lea.vmem [#allocation14], %s473
        %s475 = smul.u32 2, %s34
        %s476 = smul.u32 2, %s34
        %s477 = smul.u32 2, %s34
        %s478 = smul.u32 2, %s34
        %s479 = smul.u32 2, %s34
        %v481 = vld [vmem:[%s394] sm:$0xff]
        %v482 = vld [vmem:[%s394 + $0x8] sm:$0xff]
        %v483 = vpack.c.bf16 %v482, %v481
        %v484 = vld [vmem:[#allocation5] sm:$0xf]
        %v485 = vld [vmem:[#allocation5 + $0x4] sm:$0xf]
        %v486 = vld [vmem:[#allocation5 + $0x8] sm:$0xf]
        %v487 = vld [vmem:[#allocation5 + $0xc] sm:$0xf]
        %v488 = vld [vmem:[#allocation5 + $0x10] sm:$0xf]
        %v489 = vld [vmem:[#allocation5 + $0x14] sm:$0xf]
        %v490 = vld [vmem:[#allocation5 + $0x18] sm:$0xf]
        %v491 = vld [vmem:[#allocation5 + $0x1c] sm:$0xf]
        %v492 = vld [vmem:[#allocation5 + $0x20] sm:$0xf]
        %v493 = vld [vmem:[#allocation5 + $0x24] sm:$0xf]
        %v494 = vld [vmem:[#allocation5 + $0x28] sm:$0xf]
        %v495 = vld [vmem:[#allocation5 + $0x2c] sm:$0xf]
        %v496 = vld [vmem:[#allocation5 + $0x30] sm:$0xf]
        %v497 = vld [vmem:[#allocation5 + $0x34] sm:$0xf]
        %v498 = vld [vmem:[#allocation5 + $0x38] sm:$0xf]
        %v499 = vld [vmem:[#allocation5 + $0x3c] sm:$0xf]
        %v500 = vld [vmem:[%s2] sm:$0x1]
        %v502 = vlaneseq
        %v503 = vshrl.u32 %v502, 7
        %v504 = vsub.s32 0, %v503
        %v505 = vrot.slane %v500, %v504
        %v523 = vunpack.c.l.b16 %v484
        %v524 = vunpack.c.l.b16 %v485
        %v525 = vunpack.c.l.b16 %v486
        %v526 = vunpack.c.l.b16 %v487
        %v527 = vunpack.c.l.b16 %v488
        %v528 = vunpack.c.l.b16 %v489
        %v529 = vunpack.c.l.b16 %v490
        %v530 = vunpack.c.l.b16 %v491
        %v531 = vunpack.c.l.b16 %v492
        %v532 = vunpack.c.l.b16 %v493
        %v533 = vunpack.c.l.b16 %v494
        %v534 = vunpack.c.l.b16 %v495
        %v535 = vunpack.c.l.b16 %v496
        %v536 = vunpack.c.l.b16 %v497
        %v537 = vunpack.c.l.b16 %v498
        %v538 = vunpack.c.l.b16 %v499
        %v539 = vpack.c.b16 %v524, %v523
        %v540 = vpack.c.b16 %v526, %v525
        %v541 = vpack.c.b16 %v528, %v527
        %v542 = vpack.c.b16 %v530, %v529
        %v543 = vpack.c.b16 %v532, %v531
        %v544 = vpack.c.b16 %v534, %v533
        %v545 = vpack.c.b16 %v536, %v535
        %v546 = vpack.c.b16 %v538, %v537
        %555 = vmatprep.subr.bf16.mxu0 0
        %556 = vmatpush1.bf16.msra.mxu0 %v539
        %557 = vmatprep.subr.bf16.mxu0 0
        %558 = vmatpush1.bf16.msra.mxu0 %v540
        %559 = vmatprep.subr.bf16.mxu0 0
        %560 = vmatpush1.bf16.msra.mxu0 %v541
        %561 = vmatprep.subr.bf16.mxu0 0
        %562 = vmatpush1.bf16.msra.mxu0 %v542
        %563 = vmatprep.subr.bf16.mxu0 0
        %564 = vmatpush1.bf16.msra.mxu0 %v543
        %565 = vmatprep.subr.bf16.mxu0 0
        %566 = vmatpush1.bf16.msra.mxu0 %v544
        %567 = vmatprep.subr.bf16.mxu0 0
        %568 = vmatpush1.bf16.msra.mxu0 %v545
        %569 = vmatprep.subr.bf16.mxu0 0
        %570 = vmatpush1.bf16.msra.mxu0 %v546
        %571 = vmatprep.subr.bf16.mxu0 0
        %572 = vmatpush1.bf16.msra.mxu0 0
        %573 = vmatprep.subr.bf16.mxu0 0
        %574 = vmatpush1.bf16.msra.mxu0 0
        %575 = vmatprep.subr.bf16.mxu0 0
        %576 = vmatpush1.bf16.msra.mxu0 0
        %577 = vmatprep.subr.bf16.mxu0 0
        %578 = vmatpush1.bf16.msra.mxu0 0
        %579 = vmatprep.subr.bf16.mxu0 0
        %580 = vmatpush1.bf16.msra.mxu0 0
        %581 = vmatprep.subr.bf16.mxu0 0
        %582 = vmatpush1.bf16.msra.mxu0 0
        %583 = vmatprep.subr.bf16.mxu0 0
        %584 = vmatpush1.bf16.msra.mxu0 0
        %585 = vmatprep.subr.bf16.mxu0 0
        %586 = vmatpush1.bf16.msra.mxu0 0
        %587 = vmatprep.mubr.bf16.mxu0 0
        %588 = vmatmul.mubr.bf16.gmra.mrb[0].mxu0 %v483
        %v589 = vpop.f32.mrb[0].mxu0
        %v590 = vadd.f32 %v505, %v589
        %v591 = vpop.f32.mrb[0].mxu0
        %v592 = vpop.f32.mrb[0].mxu0
        %v593 = vadd.f32 %v505, %v592
        %v594 = vpop.f32.mrb[0].mxu0
        %595 = vdwg.mxu0
        %v596 = vld [vmem:[%s407] sm:$0xff]
        %v597 = vld [vmem:[%s407 + $0x8] sm:$0xff]
        %v598 = vpack.c.bf16 %v597, %v596
        %v599 = vld [vmem:[#allocation8] sm:$0xf]
        %v600 = vld [vmem:[#allocation8 + $0x4] sm:$0xf]
        %v601 = vld [vmem:[#allocation8 + $0x8] sm:$0xf]
        %v602 = vld [vmem:[#allocation8 + $0xc] sm:$0xf]
        %v603 = vld [vmem:[#allocation8 + $0x10] sm:$0xf]
        %v604 = vld [vmem:[#allocation8 + $0x14] sm:$0xf]
        %v605 = vld [vmem:[#allocation8 + $0x18] sm:$0xf]
        %v606 = vld [vmem:[#allocation8 + $0x1c] sm:$0xf]
        %v607 = vld [vmem:[#allocation8 + $0x20] sm:$0xf]
        %v608 = vld [vmem:[#allocation8 + $0x24] sm:$0xf]
        %v609 = vld [vmem:[#allocation8 + $0x28] sm:$0xf]
        %v610 = vld [vmem:[#allocation8 + $0x2c] sm:$0xf]
        %v611 = vld [vmem:[#allocation8 + $0x30] sm:$0xf]
        %v612 = vld [vmem:[#allocation8 + $0x34] sm:$0xf]
        %v613 = vld [vmem:[#allocation8 + $0x38] sm:$0xf]
        %v614 = vld [vmem:[#allocation8 + $0x3c] sm:$0xf]
        %v615 = vld [vmem:[%s5] sm:$0x1]
        %v617 = vlaneseq
        %v618 = vshrl.u32 %v617, 7
        %v619 = vsub.s32 0, %v618
        %v620 = vrot.slane %v615, %v619
        %v638 = vunpack.c.l.b16 %v599
        %v639 = vunpack.c.l.b16 %v600
        %v640 = vunpack.c.l.b16 %v601
        %v641 = vunpack.c.l.b16 %v602
        %v642 = vunpack.c.l.b16 %v603
        %v643 = vunpack.c.l.b16 %v604
        %v644 = vunpack.c.l.b16 %v605
        %v645 = vunpack.c.l.b16 %v606
        %v646 = vunpack.c.l.b16 %v607
        %v647 = vunpack.c.l.b16 %v608
        %v648 = vunpack.c.l.b16 %v609
        %v649 = vunpack.c.l.b16 %v610
        %v650 = vunpack.c.l.b16 %v611
        %v651 = vunpack.c.l.b16 %v612
        %v652 = vunpack.c.l.b16 %v613
        %v653 = vunpack.c.l.b16 %v614
        %v654 = vpack.c.b16 %v639, %v638
        %v655 = vpack.c.b16 %v641, %v640
        %v656 = vpack.c.b16 %v643, %v642
        %v657 = vpack.c.b16 %v645, %v644
        %v658 = vpack.c.b16 %v647, %v646
        %v659 = vpack.c.b16 %v649, %v648
        %v660 = vpack.c.b16 %v651, %v650
        %v661 = vpack.c.b16 %v653, %v652
        %670 = vmatprep.subr.bf16.mxu0 0
        %671 = vmatpush1.bf16.msra.mxu0 %v654
        %672 = vmatprep.subr.bf16.mxu0 0
        %673 = vmatpush1.bf16.msra.mxu0 %v655
        %674 = vmatprep.subr.bf16.mxu0 0
        %675 = vmatpush1.bf16.msra.mxu0 %v656
        %676 = vmatprep.subr.bf16.mxu0 0
        %677 = vmatpush1.bf16.msra.mxu0 %v657
        %678 = vmatprep.subr.bf16.mxu0 0
        %679 = vmatpush1.bf16.msra.mxu0 %v658
        %680 = vmatprep.subr.bf16.mxu0 0
        %681 = vmatpush1.bf16.msra.mxu0 %v659
        %682 = vmatprep.subr.bf16.mxu0 0
        %683 = vmatpush1.bf16.msra.mxu0 %v660
        %684 = vmatprep.subr.bf16.mxu0 0
        %685 = vmatpush1.bf16.msra.mxu0 %v661
        %686 = vmatprep.subr.bf16.mxu0 0
        %687 = vmatpush1.bf16.msra.mxu0 0
        %688 = vmatprep.subr.bf16.mxu0 0
        %689 = vmatpush1.bf16.msra.mxu0 0
        %690 = vmatprep.subr.bf16.mxu0 0
        %691 = vmatpush1.bf16.msra.mxu0 0
        %692 = vmatprep.subr.bf16.mxu0 0
        %693 = vmatpush1.bf16.msra.mxu0 0
        %694 = vmatprep.subr.bf16.mxu0 0
        %695 = vmatpush1.bf16.msra.mxu0 0
        %696 = vmatprep.subr.bf16.mxu0 0
        %697 = vmatpush1.bf16.msra.mxu0 0
        %698 = vmatprep.subr.bf16.mxu0 0
        %699 = vmatpush1.bf16.msra.mxu0 0
        %700 = vmatprep.subr.bf16.mxu0 0
        %701 = vmatpush1.bf16.msra.mxu0 0
        %702 = vmatprep.mubr.bf16.mxu0 0
        %703 = vmatmul.mubr.bf16.gmra.mrb[0].mxu0 %v598
        %v704 = vpop.f32.mrb[0].mxu0
        %v705 = vadd.f32 %v620, %v704
        %v706 = vpop.f32.mrb[0].mxu0
        %v707 = vpop.f32.mrb[0].mxu0
        %v708 = vadd.f32 %v620, %v707
        %v709 = vpop.f32.mrb[0].mxu0
        %710 = vdwg.mxu0
        %v711 = vpack.c.bf16 %v593, %v590
        %v713 = vunpack.c.l.b16 %v711
        %v714 = vunpack.c.h.b16 %v711
        %v715 = vpack.c.b16 %v713, %v713
        %v716 = vpack.c.b16 %v714, %v714
        %719 = vst [vmem:[%s460] sm:$0xf] %v715
        %720 = vst [vmem:[%s460 + $0x4] sm:$0xf] %v716
        %v721 = vpack.c.bf16 %v708, %v705
        %v723 = vunpack.c.l.b16 %v721
        %v724 = vunpack.c.h.b16 %v721
        %v725 = vpack.c.b16 %v723, %v723
        %v726 = vpack.c.b16 %v724, %v724
        %729 = vst [vmem:[%s467] sm:$0xf] %v725
        %730 = vst [vmem:[%s467 + $0x4] sm:$0xf] %v726
        %v731 = vadd.f32 %v590, %v705
        %v732 = vadd.f32 %v593, %v708
        %v733 = vld [vmem:[%s420] sm:$0xff]
        %v734 = vld [vmem:[%s420 + $0x8] sm:$0xff]
        %v735 = vsub.f32 %v731, %v733
        %v736 = vsub.f32 %v732, %v734
        %v737 = vmul.f32 %v735, %v735
        %v738 = vmul.f32 %v736, %v736
        %v739 = vadd.f32 %v737, %v738
        %740 = vst [vmem:[%s474] sm:$0xff] %v739
        %s741 = sand.u32 %s204, 1
        %s742 = scalar_lea.sflag [#allocation4], %s741
        %s743 = sand.u32 %s204, 1
        %s744 = smul.addr %s743, 8
        %s745 = scalar_lea.vmem [#allocation11], %s744
        %s746 = sand.u32 %s34, 1
        %s747 = scalar_lea.sflag [#allocation13], %s746
        %s748 = sand.u32 %s230, 1
        %s749 = smul.addr %s748, 8
        %s750 = scalar_lea.vmem [#allocation12], %s749
        %s751 = sand.u32 %s34, 1
        %s752 = scalar_lea.sflag [#allocation13], %s751
        %s753 = sand.u32 %s256, 1
        %s754 = smul.addr %s753, 8
        %s755 = scalar_lea.vmem [#allocation14], %s754
        // Predicated region
        $region69: #{tpu_custom_call.1} parent=47 // pred_check
          %p756 = pneg %p214
        $region70: #{tpu_custom_call.1} parent=47 // pred_check_branch
          %758 = sbr.rel (%p756) target = $region72
        $region71: #{tpu_custom_call.1} parent=47 // pred_region
          %s759 = smul.u32 2, %s34
          %s761 = ssub.s32 128, 128
          %762 = vsyncadd %s742, %s761
          %s763 = smul.addr %s759, 64
          %s764 = scalar_lea.hbm %s7, %s763
          %s765 = sshll.u32 %s745, 4
          %s766 = int_to_ptr.vmem [resolvable:$true] %s765
          %771 = dma.vmem_to_hbm [thread:$0]  %s766, 128, %s764, %s742, 64, 64, 4
        $region72: #{tpu_custom_call.1} parent=47 // pred_fallthru
          _
        // Predicated region
        $region73: #{tpu_custom_call.1} parent=47 // pred_check
          %p772 = pneg %p240
        $region74: #{tpu_custom_call.1} parent=47 // pred_check_branch
          %774 = sbr.rel (%p772) target = $region76
        $region75: #{tpu_custom_call.1} parent=47 // pred_region
          %s775 = smul.u32 2, %s34
          %s777 = ssub.s32 128, 128
          %778 = vsyncadd %s747, %s777
          %s779 = smul.addr %s775, 64
          %s780 = scalar_lea.hbm %s8, %s779
          %s781 = sshll.u32 %s750, 4
          %s782 = int_to_ptr.vmem [resolvable:$true] %s781
          %787 = dma.vmem_to_hbm [thread:$0]  %s782, 128, %s780, %s747, 64, 64, 4
        $region76: #{tpu_custom_call.1} parent=47 // pred_fallthru
          _
        // Predicated region
        $region77: #{tpu_custom_call.1} parent=47 // pred_check
          %p788 = pneg %p266
        $region78: #{tpu_custom_call.1} parent=47 // pred_check_branch
          %790 = sbr.rel (%p788) target = $region80
        $region79: #{tpu_custom_call.1} parent=47 // pred_region
          %s792 = ssub.s32 128, 128
          %793 = vsyncadd %s752, %s792
          %s794 = smul.addr %s34, 128
          %s795 = scalar_lea.hbm %s9, %s794
          %s797 = sshll.u32 %s755, 4
          %s798 = int_to_ptr.vmem [resolvable:$true] %s797
          %800 = dma.vmem_to_hbm [thread:$0]  %s798, 128, %s795, %s752
        $region80: #{tpu_custom_call.1} parent=47 // pred_fallthru
          _
      $region48: #{tpu_custom_call.1} parent=5 // pred_fallthru
        _
      %p801 = scmp.le.s32.totalorder 2, %s29
      // Predicated region
      $region81: #{tpu_custom_call.1} parent=5 // pred_check
        %p802 = pneg %p801
      $region82: #{tpu_custom_call.1} parent=5 // pred_check_branch
        %804 = sbr.rel (%p802) target = $region84
      $region83: #{tpu_custom_call.1} parent=5 // pred_region
        %s805 = ssub.s32 %s29, 2
        // Predicated region
        $region85: #{tpu_custom_call.1} parent=83 // pred_check
          %p806 = pneg %p220
        $region86: #{tpu_custom_call.1} parent=83 // pred_check_branch
          %808 = sbr.rel (%p806) target = $region88
        $region87: #{tpu_custom_call.1} parent=83 // pred_region
          %s809 = sand.u32 %s205, 1
          %s810 = scalar_lea.sflag [#allocation4], %s809
          %s811 = sand.u32 %s205, 1
          %s812 = smul.addr %s811, 8
          %s813 = scalar_lea.vmem [#allocation11], %s812
          %814 = dma.done %s810, 128
        $region88: #{tpu_custom_call.1} parent=83 // pred_fallthru
          _
        // Predicated region
        $region89: #{tpu_custom_call.1} parent=83 // pred_check
          %p815 = pneg %p246
        $region90: #{tpu_custom_call.1} parent=83 // pred_check_branch
          %817 = sbr.rel (%p815) target = $region92
        $region91: #{tpu_custom_call.1} parent=83 // pred_region
          %s818 = sand.u32 %s35, 1
          %s819 = scalar_lea.sflag [#allocation13], %s818
          %s820 = sand.u32 %s231, 1
          %s821 = smul.addr %s820, 8
          %s822 = scalar_lea.vmem [#allocation12], %s821
          %823 = dma.done %s819, 128
        $region92: #{tpu_custom_call.1} parent=83 // pred_fallthru
          _
        // Predicated region
        $region93: #{tpu_custom_call.1} parent=83 // pred_check
          %p824 = pneg %p272
        $region94: #{tpu_custom_call.1} parent=83 // pred_check_branch
          %826 = sbr.rel (%p824) target = $region96
        $region95: #{tpu_custom_call.1} parent=83 // pred_region
          %s827 = sand.u32 %s35, 1
          %s828 = scalar_lea.sflag [#allocation13], %s827
          %s829 = sand.u32 %s257, 1
          %s830 = smul.addr %s829, 8
          %s831 = scalar_lea.vmem [#allocation14], %s830
          %832 = dma.done %s828, 128
        $region96: #{tpu_custom_call.1} parent=83 // pred_fallthru
          _
      $region84: #{tpu_custom_call.1} parent=5 // pred_fallthru
        _
    $region6: #{tpu_custom_call.1} parent=1 // loop_footer
      %s33 = sadd.s32 1, %s29
    $region7: #{tpu_custom_call.1} parent=1 // loop_footer_branch
      %28 = sbr.rel target = $region3
    $region8: #{tpu_custom_call.1} parent=1 // loop_exit
      _
    %833 = vsyncpa [#allocation3], 1
    %s834 = scalar_lea.sflag [#allocation3], 1
    %835 = vsyncpa %s834, 1
    %836 = vsyncpa [#allocation6], 1
    %837 = vsyncpa [#allocation10], 1
    %s838 = scalar_lea.sflag [#allocation10], 1
    %839 = vsyncpa %s838, 1
    %840 = vsyncpa [#allocation4], 1
    %s841 = scalar_lea.sflag [#allocation4], 1
    %842 = vsyncpa %s841, 1
    %843 = vsyncpa [#allocation13], 1
    %s844 = scalar_lea.sflag [#allocation13], 1
    %845 = vsyncpa %s844, 1

</llo_original>
